<compile_context>
chip_gen: v5e
topology: v5e:2x2
jax: 0.10.0
libtpu: 0.0.40
codegen_flags: <defaults>
</compile_context>

<pallas_src>
import functools

import jax
import jax.numpy as jnp
from jax.experimental import pallas as pl
from jax.experimental.pallas import tpu as pltpu

_NEG_INF = -1e30
_LANE = 128


def _round_up(n, m):
    return ((n + m - 1) // m) * m


# ----------------------------------------------------------------------------
# Kernel
# ----------------------------------------------------------------------------
def _mlp_kernel(x_ref,
                w1_ref, w2_ref, w3_ref, w4_ref, w5_ref, w6_ref,
                b1_ref, b2_ref, b3_ref, b4_ref, b5_ref, b6_ref,
                out_ref):
    """One batch tile: 6 matmuls (bf16 in, f32 acc) + ReLU + softmax."""

    def lin(h_bf16, w_ref, b_ref):
        acc = jnp.dot(h_bf16, w_ref[...], preferred_element_type=jnp.float32)
        return acc + b_ref[...]          # bias is f32, broadcast over sublanes

    def hidden(h_bf16, w_ref, b_ref):
        # ReLU in the f32 accumulator; re-cast to bf16 only to feed the MXU.
        return jnp.maximum(lin(h_bf16, w_ref, b_ref), 0.0).astype(jnp.bfloat16)

    h = hidden(x_ref[...], w1_ref, b1_ref)     # BN1..BN5 + dropout folded away
    h = hidden(h, w2_ref, b2_ref)
    h = hidden(h, w3_ref, b3_ref)
    h = hidden(h, w4_ref, b4_ref)
    h = hidden(h, w5_ref, b5_ref)

    logits = lin(h, w6_ref, b6_ref)            # padded logits carry -1e30 bias

    # softmax over dim=1 (feature/lane axis)
    m = jnp.max(logits, axis=1, keepdims=True)
    e = jnp.exp(logits - m)
    denom = jnp.sum(e, axis=1, keepdims=True)
    out_ref[...] = e * pl.reciprocal(denom, approx=True)


# ----------------------------------------------------------------------------
# Wrapper
# ----------------------------------------------------------------------------
def mlp_forward(x, prep, tb=None):
    """x: (B, in_dim) f32. prep: output of prepare_kernel_params."""
    ws, bs, out_dim = prep["ws"], prep["bs"], prep["out_dim"]
    B, in_dim = x.shape
    out_pad = ws[5].shape[1]

    # Batch tile: multiple of 8 sublanes; capped so it transfers to v7x's
    # smaller VMEM. Large batches get 512-row tiles (multiple of the 256 MXU
    # edge on v6e/v7x and of 128 on v5e).
    if tb is None:
        tb = min(512, _round_up(max(B, 1), 8))
    b_pad = _round_up(B, tb)

    xb = x.astype(jnp.bfloat16)
    if b_pad != B:
        xb = jnp.pad(xb, ((0, b_pad - B), (0, 0)))

    def const2d(a):  # full-array block, constant index_map -> VMEM-resident
        return pl.BlockSpec(a.shape, lambda i: (0, 0))

    in_specs = ([pl.BlockSpec((tb, in_dim), lambda i: (i, 0))]
                + [const2d(w) for w in ws]
                + [const2d(b) for b in bs])
    out_spec = pl.BlockSpec((tb, out_pad), lambda i: (i, 0))

    out = pl.pallas_call(
        _mlp_kernel,
        out_shape=jax.ShapeDtypeStruct((b_pad, out_pad), jnp.float32),
        grid=(b_pad // tb,),
        in_specs=in_specs,
        out_specs=out_spec,
        compiler_params=pltpu.CompilerParams(
            dimension_semantics=("parallel",),      # megacore on v7x
            vmem_limit_bytes=32 * 1024 * 1024,
        ),
    )(xb, *ws, *bs)

    return out[:B, :out_dim]


# ----------------------------------------------------------------------------
# Parameter construction / preparation
# ----------------------------------------------------------------------------
def make_raw_params(key, in_dim, h1, h2, h3, h4, h5, out_dim):
    """PyTorch-style raw params: weights (out, in), U(-1/sqrt(fan_in), ...)."""
    def lin(k, fan_in, fan_out, bias):
        kw, kb = jax.random.split(k)
        bound = 1.0 / jnp.sqrt(jnp.float32(fan_in))
        w = jax.random.uniform(kw, (fan_out, fan_in), jnp.float32, -bound, bound)
        b = (jax.random.uniform(kb, (fan_out,), jnp.float32, -bound, bound)
             if bias else None)
        return w, b

    ks = jax.random.split(key, 6)
    w1, b1 = lin(ks[0], in_dim, h1, True)
    w2, _ = lin(ks[1], h1, h2, False)
    w3, _ = lin(ks[2], h2, h3, False)
    w4, _ = lin(ks[3], h3, h4, False)
    w5, _ = lin(ks[4], h4, h5, False)
    w6, b6 = lin(ks[5], h5, out_dim, True)

    # BatchNorm1d(1), eval mode, fresh-initialized stats/affine:
    # scale = gamma / sqrt(var + eps) = 1/sqrt(1+eps), shift = beta - mean*scale = 0
    eps = 1e-5
    gamma = jnp.ones((5,), jnp.float32)
    beta = jnp.zeros((5,), jnp.float32)
    run_mean = jnp.zeros((5,), jnp.float32)
    run_var = jnp.ones((5,), jnp.float32)
    bn_scale = gamma / jnp.sqrt(run_var + eps)
    bn_shift = beta - run_mean * bn_scale

    return (w1, b1, w2, w3, w4, w5, w6, b6, bn_scale, bn_shift)


def prepare_kernel_params(raw):
    """Transpose, fold eval-mode BN (and identity dropout) into the adjacent
    Linear, zero-pad feature dims to multiples of 128 lanes, cast weights to
    bf16. Padded output-logit bias columns are set to -1e30 for the softmax."""
    w1, b1, w2, w3, w4, w5, w6, b6, bn_scale, bn_shift = raw
    torch_ws = [w1, w2, w3, w4, w5, w6]                 # (out, in)
    torch_bs = [b1, None, None, None, None, b6]

    folded_ws, folded_bs = [], []
    for idx in range(6):
        wt = torch_ws[idx].T                            # (in, out)
        b = (torch_bs[idx] if torch_bs[idx] is not None
             else jnp.zeros((wt.shape[1],), jnp.float32))
        if idx > 0:
            # BN after ReLU of layer idx-1:  z = s*a + t
            # => z @ Wt = s*(a @ Wt) + t*(1 @ Wt)  -> fold s into W, t into bias.
            s = bn_scale[idx - 1]
            t = bn_shift[idx - 1]
            b = b + t * jnp.sum(wt, axis=0)
            wt = wt * s
        folded_ws.append(wt)
        folded_bs.append(b)

    in_dim = folded_ws[0].shape[0]
    dims = [in_dim] + [w.shape[1] for w in folded_ws]   # [in, h1..h5, out]
    pdims = [in_dim] + [_round_up(d, _LANE) for d in dims[1:]]
    out_dim = dims[-1]

    ws_k, bs_k = [], []
    for idx in range(6):
        wt = folded_ws[idx]
        wt = jnp.pad(wt, ((0, pdims[idx] - wt.shape[0]),
                          (0, pdims[idx + 1] - wt.shape[1])))
        ws_k.append(wt.astype(jnp.bfloat16))

        b = folded_bs[idx]
        fill = _NEG_INF if idx == 5 else 0.0            # mask padded logits
        b = jnp.pad(b, (0, pdims[idx + 1] - b.shape[0]), constant_values=fill)
        bs_k.append(b.reshape(1, -1).astype(jnp.float32))

    return {"ws": tuple(ws_k), "bs": tuple(bs_k), "out_dim": out_dim}


# ----------------------------------------------------------------------------
# References
# ----------------------------------------------------------------------------
def _reference_f32(x, raw):
    """Pure-f32, unfolded reference of the PyTorch forward (eval mode)."""
    w1, b1, w2, w3, w4, w5, w6, b6, s, t = raw

    def bn_relu(h, i):
        return jnp.maximum(h, 0.0) * s[i] + t[i]

    h = bn_relu(x @ w1.T + b1, 0)
    h = bn_relu(h @ w2.T, 1)
    h = bn_relu(h @ w3.T, 2)
    h = bn_relu(h @ w4.T, 3)
    h = bn_relu(h @ w5.T, 4)
    logits = h @ w6.T + b6
    return jax.nn.softmax(logits, axis=1)


def _reference_mirror(x, prep):
    """Mirrors the kernel arithmetic (folded/padded params, bf16 matmuls)."""
    ws, bs, out_dim = prep["ws"], prep["bs"], prep["out_dim"]
    h = x.astype(jnp.bfloat16)
    for i in range(5):
        a = jnp.dot(h, ws[i], preferred_element_type=jnp.float32) + bs[i]
        h = jnp.maximum(a, 0.0).astype(jnp.bfloat16)
    logits = jnp.dot(h, ws[5], preferred_element_type=jnp.float32) + bs[5]
    return jax.nn.softmax(logits, axis=1)[:, :out_dim]


# ----------------------------------------------------------------------------
if __name__ == "__main__":
    B, in_dim = 20, 32
    h1 = h2 = h3 = h4 = h5 = 64
    out_dim = 16

    key = jax.random.PRNGKey(0)
    kx, kp = jax.random.split(key)
    x = jax.random.normal(kx, (B, in_dim), dtype=jnp.float32)

    raw = make_raw_params(kp, in_dim, h1, h2, h3, h4, h5, out_dim)
    prep = prepare_kernel_params(raw)

    # Small tile so the test exercises the batch grid (grid=(3,)) and the
    # batch-padding / slice-back path (B=20 -> B_pad=24).
    out = mlp_forward(x, prep, tb=8)
    out = jax.block_until_ready(out)

    ref_mirror = _reference_mirror(x, prep)     # same arithmetic as kernel
    ref_f32 = _reference_f32(x, raw)            # unfolded pure-f32 reference

    assert out.shape == (B, out_dim)
    assert bool(jnp.allclose(out, ref_mirror, atol=1e-3)), "mirror mismatch"
    assert bool(jnp.allclose(out, ref_f32, atol=1e-2)), "f32 reference mismatch"
    assert bool(jnp.allclose(jnp.sum(out, axis=1), 1.0, atol=1e-2))

    print("KERNEL_OK")
</pallas_src>

<mosaic_0001>
module attributes {stable_mosaic.version = 11 : i64} {
  func.func @_mlp_kernel(%arg0: i32, %arg1: memref<8x32xbf16, #tpu.memory_space<vmem>>, %arg2: memref<32x128xbf16, #tpu.memory_space<vmem>>, %arg3: memref<128x128xbf16, #tpu.memory_space<vmem>>, %arg4: memref<128x128xbf16, #tpu.memory_space<vmem>>, %arg5: memref<128x128xbf16, #tpu.memory_space<vmem>>, %arg6: memref<128x128xbf16, #tpu.memory_space<vmem>>, %arg7: memref<128x128xbf16, #tpu.memory_space<vmem>>, %arg8: memref<1x128xf32, #tpu.memory_space<vmem>>, %arg9: memref<1x128xf32, #tpu.memory_space<vmem>>, %arg10: memref<1x128xf32, #tpu.memory_space<vmem>>, %arg11: memref<1x128xf32, #tpu.memory_space<vmem>>, %arg12: memref<1x128xf32, #tpu.memory_space<vmem>>, %arg13: memref<1x128xf32, #tpu.memory_space<vmem>>, %arg14: memref<8x128xf32, #tpu.memory_space<vmem>>) attributes {dimension_semantics = [#tpu.dimension_semantics<parallel>], iteration_bounds = array<i64: 3>, scalar_prefetch = 0 : i64, scratch_operands = 0 : i64, tpu.core_type = #tpu.core_type<tc>, window_params = [{transform_indices = @transform_0, window_bounds = array<i64: 8, 32>}, {pipeline_mode = #tpu.pipeline_mode<synchronous>, transform_indices = @transform_1, window_bounds = array<i64: 32, 128>}, {pipeline_mode = #tpu.pipeline_mode<synchronous>, transform_indices = @transform_2, window_bounds = array<i64: 128, 128>}, {pipeline_mode = #tpu.pipeline_mode<synchronous>, transform_indices = @transform_3, window_bounds = array<i64: 128, 128>}, {pipeline_mode = #tpu.pipeline_mode<synchronous>, transform_indices = @transform_4, window_bounds = array<i64: 128, 128>}, {pipeline_mode = #tpu.pipeline_mode<synchronous>, transform_indices = @transform_5, window_bounds = array<i64: 128, 128>}, {pipeline_mode = #tpu.pipeline_mode<synchronous>, transform_indices = @transform_6, window_bounds = array<i64: 128, 128>}, {pipeline_mode = #tpu.pipeline_mode<synchronous>, transform_indices = @transform_7, window_bounds = array<i64: 1, 128>}, {pipeline_mode = #tpu.pipeline_mode<synchronous>, transform_indices = @transform_8, window_bounds = array<i64: 1, 128>}, {pipeline_mode = #tpu.pipeline_mode<synchronous>, transform_indices = @transform_9, window_bounds = array<i64: 1, 128>}, {pipeline_mode = #tpu.pipeline_mode<synchronous>, transform_indices = @transform_10, window_bounds = array<i64: 1, 128>}, {pipeline_mode = #tpu.pipeline_mode<synchronous>, transform_indices = @transform_11, window_bounds = array<i64: 1, 128>}, {pipeline_mode = #tpu.pipeline_mode<synchronous>, transform_indices = @transform_12, window_bounds = array<i64: 1, 128>}, {transform_indices = @transform_13, window_bounds = array<i64: 8, 128>}]} {
    %c0 = arith.constant 0 : index
    %c0_0 = arith.constant 0 : index
    %0 = vector.load %arg1[%c0, %c0_0] : memref<8x32xbf16, #tpu.memory_space<vmem>>, vector<8x32xbf16>
    %c0_1 = arith.constant 0 : index
    %c0_2 = arith.constant 0 : index
    %1 = vector.load %arg2[%c0_1, %c0_2] : memref<32x128xbf16, #tpu.memory_space<vmem>>, vector<32x128xbf16>
    %cst = arith.constant dense<0.000000e+00> : vector<8x128xf32>
    %2 = tpu.matmul %0, %1, %cst {dimension_numbers = #tpu.dot_dimension_numbers<[1], [0], [0], [1], [0, 0, 1, 1], [], []>} : vector<8x32xbf16>, vector<32x128xbf16>, vector<8x128xf32> -> vector<8x128xf32>
    %c0_3 = arith.constant 0 : index
    %c0_4 = arith.constant 0 : index
    %3 = vector.load %arg8[%c0_3, %c0_4] : memref<1x128xf32, #tpu.memory_space<vmem>>, vector<1x128xf32>
    %4 = vector.broadcast %3 : vector<1x128xf32> to vector<8x128xf32>
    %5 = arith.addf %2, %4 : vector<8x128xf32>
    %cst_5 = arith.constant 0.000000e+00 : f32
    %6 = vector.broadcast %cst_5 : f32 to vector<8x128xf32>
    %7 = arith.maximumf %5, %6 : vector<8x128xf32>
    %8 = arith.truncf %7 : vector<8x128xf32> to vector<8x128xbf16>
    %c0_6 = arith.constant 0 : index
    %c0_7 = arith.constant 0 : index
    %9 = vector.load %arg3[%c0_6, %c0_7] : memref<128x128xbf16, #tpu.memory_space<vmem>>, vector<128x128xbf16>
    %cst_8 = arith.constant dense<0.000000e+00> : vector<8x128xf32>
    %10 = tpu.matmul %8, %9, %cst_8 {dimension_numbers = #tpu.dot_dimension_numbers<[1], [0], [0], [1], [0, 0, 1, 1], [], []>} : vector<8x128xbf16>, vector<128x128xbf16>, vector<8x128xf32> -> vector<8x128xf32>
    %c0_9 = arith.constant 0 : index
    %c0_10 = arith.constant 0 : index
    %11 = vector.load %arg9[%c0_9, %c0_10] : memref<1x128xf32, #tpu.memory_space<vmem>>, vector<1x128xf32>
    %12 = vector.broadcast %11 : vector<1x128xf32> to vector<8x128xf32>
    %13 = arith.addf %10, %12 : vector<8x128xf32>
    %cst_11 = arith.constant 0.000000e+00 : f32
    %14 = vector.broadcast %cst_11 : f32 to vector<8x128xf32>
    %15 = arith.maximumf %13, %14 : vector<8x128xf32>
    %16 = arith.truncf %15 : vector<8x128xf32> to vector<8x128xbf16>
    %c0_12 = arith.constant 0 : index
    %c0_13 = arith.constant 0 : index
    %17 = vector.load %arg4[%c0_12, %c0_13] : memref<128x128xbf16, #tpu.memory_space<vmem>>, vector<128x128xbf16>
    %cst_14 = arith.constant dense<0.000000e+00> : vector<8x128xf32>
    %18 = tpu.matmul %16, %17, %cst_14 {dimension_numbers = #tpu.dot_dimension_numbers<[1], [0], [0], [1], [0, 0, 1, 1], [], []>} : vector<8x128xbf16>, vector<128x128xbf16>, vector<8x128xf32> -> vector<8x128xf32>
    %c0_15 = arith.constant 0 : index
    %c0_16 = arith.constant 0 : index
    %19 = vector.load %arg10[%c0_15, %c0_16] : memref<1x128xf32, #tpu.memory_space<vmem>>, vector<1x128xf32>
    %20 = vector.broadcast %19 : vector<1x128xf32> to vector<8x128xf32>
    %21 = arith.addf %18, %20 : vector<8x128xf32>
    %cst_17 = arith.constant 0.000000e+00 : f32
    %22 = vector.broadcast %cst_17 : f32 to vector<8x128xf32>
    %23 = arith.maximumf %21, %22 : vector<8x128xf32>
    %24 = arith.truncf %23 : vector<8x128xf32> to vector<8x128xbf16>
    %c0_18 = arith.constant 0 : index
    %c0_19 = arith.constant 0 : index
    %25 = vector.load %arg5[%c0_18, %c0_19] : memref<128x128xbf16, #tpu.memory_space<vmem>>, vector<128x128xbf16>
    %cst_20 = arith.constant dense<0.000000e+00> : vector<8x128xf32>
    %26 = tpu.matmul %24, %25, %cst_20 {dimension_numbers = #tpu.dot_dimension_numbers<[1], [0], [0], [1], [0, 0, 1, 1], [], []>} : vector<8x128xbf16>, vector<128x128xbf16>, vector<8x128xf32> -> vector<8x128xf32>
    %c0_21 = arith.constant 0 : index
    %c0_22 = arith.constant 0 : index
    %27 = vector.load %arg11[%c0_21, %c0_22] : memref<1x128xf32, #tpu.memory_space<vmem>>, vector<1x128xf32>
    %28 = vector.broadcast %27 : vector<1x128xf32> to vector<8x128xf32>
    %29 = arith.addf %26, %28 : vector<8x128xf32>
    %cst_23 = arith.constant 0.000000e+00 : f32
    %30 = vector.broadcast %cst_23 : f32 to vector<8x128xf32>
    %31 = arith.maximumf %29, %30 : vector<8x128xf32>
    %32 = arith.truncf %31 : vector<8x128xf32> to vector<8x128xbf16>
    %c0_24 = arith.constant 0 : index
    %c0_25 = arith.constant 0 : index
    %33 = vector.load %arg6[%c0_24, %c0_25] : memref<128x128xbf16, #tpu.memory_space<vmem>>, vector<128x128xbf16>
    %cst_26 = arith.constant dense<0.000000e+00> : vector<8x128xf32>
    %34 = tpu.matmul %32, %33, %cst_26 {dimension_numbers = #tpu.dot_dimension_numbers<[1], [0], [0], [1], [0, 0, 1, 1], [], []>} : vector<8x128xbf16>, vector<128x128xbf16>, vector<8x128xf32> -> vector<8x128xf32>
    %c0_27 = arith.constant 0 : index
    %c0_28 = arith.constant 0 : index
    %35 = vector.load %arg12[%c0_27, %c0_28] : memref<1x128xf32, #tpu.memory_space<vmem>>, vector<1x128xf32>
    %36 = vector.broadcast %35 : vector<1x128xf32> to vector<8x128xf32>
    %37 = arith.addf %34, %36 : vector<8x128xf32>
    %cst_29 = arith.constant 0.000000e+00 : f32
    %38 = vector.broadcast %cst_29 : f32 to vector<8x128xf32>
    %39 = arith.maximumf %37, %38 : vector<8x128xf32>
    %40 = arith.truncf %39 : vector<8x128xf32> to vector<8x128xbf16>
    %c0_30 = arith.constant 0 : index
    %c0_31 = arith.constant 0 : index
    %41 = vector.load %arg7[%c0_30, %c0_31] : memref<128x128xbf16, #tpu.memory_space<vmem>>, vector<128x128xbf16>
    %cst_32 = arith.constant dense<0.000000e+00> : vector<8x128xf32>
    %42 = tpu.matmul %40, %41, %cst_32 {dimension_numbers = #tpu.dot_dimension_numbers<[1], [0], [0], [1], [0, 0, 1, 1], [], []>} : vector<8x128xbf16>, vector<128x128xbf16>, vector<8x128xf32> -> vector<8x128xf32>
    %c0_33 = arith.constant 0 : index
    %c0_34 = arith.constant 0 : index
    %43 = vector.load %arg13[%c0_33, %c0_34] : memref<1x128xf32, #tpu.memory_space<vmem>>, vector<1x128xf32>
    %44 = vector.broadcast %43 : vector<1x128xf32> to vector<8x128xf32>
    %45 = arith.addf %42, %44 : vector<8x128xf32>
    %cst_35 = arith.constant dense<0xFF800000> : vector<8xf32>
    %46 = vector.multi_reduction <maximumf>, %45, %cst_35 [1] : vector<8x128xf32> to vector<8xf32>
    %47 = vector.shape_cast %46 : vector<8xf32> to vector<8x1xf32>
    %48 = vector.broadcast %47 : vector<8x1xf32> to vector<8x128xf32>
    %49 = arith.subf %45, %48 : vector<8x128xf32>
    %50 = math.exp %49 : vector<8x128xf32>
    %cst_36 = arith.constant dense<0.000000e+00> : vector<8xf32>
    %51 = vector.multi_reduction <add>, %50, %cst_36 [1] : vector<8x128xf32> to vector<8xf32>
    %52 = vector.shape_cast %51 : vector<8xf32> to vector<8x1xf32>
    %53 = tpu.reciprocal %52 {approx = true} : vector<8x1xf32> -> vector<8x1xf32>
    %54 = vector.broadcast %53 : vector<8x1xf32> to vector<8x128xf32>
    %55 = arith.mulf %50, %54 : vector<8x128xf32>
    %c0_37 = arith.constant 0 : index
    %c0_38 = arith.constant 0 : index
    %56 = vector.load %arg14[%c0_37, %c0_38] : memref<8x128xf32, #tpu.memory_space<vmem>>, vector<8x128xf32>
    tpu.vector_store %arg14[%c0_37, %c0_38], %55 {strides = array<i32>} : memref<8x128xf32, #tpu.memory_space<vmem>>, vector<8x128xf32>,
    return
  }
  func.func @transform_0(%arg0: i32) -> (i32, i32) {
    %c0_i32 = arith.constant 0 : i32
    %c0_i32_0 = arith.constant 0 : i32
    return %arg0, %c0_i32 : i32, i32
  }
  func.func @transform_1(%arg0: i32) -> (i32, i32) {
    %c0_i32 = arith.constant 0 : i32
    %c0_i32_0 = arith.constant 0 : i32
    %c0_i32_1 = arith.constant 0 : i32
    return %c0_i32, %c0_i32_0 : i32, i32
  }
  func.func @transform_2(%arg0: i32) -> (i32, i32) {
    %c0_i32 = arith.constant 0 : i32
    %c0_i32_0 = arith.constant 0 : i32
    %c0_i32_1 = arith.constant 0 : i32
    return %c0_i32, %c0_i32_0 : i32, i32
  }
  func.func @transform_3(%arg0: i32) -> (i32, i32) {
    %c0_i32 = arith.constant 0 : i32
    %c0_i32_0 = arith.constant 0 : i32
    %c0_i32_1 = arith.constant 0 : i32
    return %c0_i32, %c0_i32_0 : i32, i32
  }
  func.func @transform_4(%arg0: i32) -> (i32, i32) {
    %c0_i32 = arith.constant 0 : i32
    %c0_i32_0 = arith.constant 0 : i32
    %c0_i32_1 = arith.constant 0 : i32
    return %c0_i32, %c0_i32_0 : i32, i32
  }
  func.func @transform_5(%arg0: i32) -> (i32, i32) {
    %c0_i32 = arith.constant 0 : i32
    %c0_i32_0 = arith.constant 0 : i32
    %c0_i32_1 = arith.constant 0 : i32
    return %c0_i32, %c0_i32_0 : i32, i32
  }
  func.func @transform_6(%arg0: i32) -> (i32, i32) {
    %c0_i32 = arith.constant 0 : i32
    %c0_i32_0 = arith.constant 0 : i32
    %c0_i32_1 = arith.constant 0 : i32
    return %c0_i32, %c0_i32_0 : i32, i32
  }
  func.func @transform_7(%arg0: i32) -> (i32, i32) {
    %c0_i32 = arith.constant 0 : i32
    %c0_i32_0 = arith.constant 0 : i32
    %c0_i32_1 = arith.constant 0 : i32
    return %c0_i32, %c0_i32_0 : i32, i32
  }
  func.func @transform_8(%arg0: i32) -> (i32, i32) {
    %c0_i32 = arith.constant 0 : i32
    %c0_i32_0 = arith.constant 0 : i32
    %c0_i32_1 = arith.constant 0 : i32
    return %c0_i32, %c0_i32_0 : i32, i32
  }
  func.func @transform_9(%arg0: i32) -> (i32, i32) {
    %c0_i32 = arith.constant 0 : i32
    %c0_i32_0 = arith.constant 0 : i32
    %c0_i32_1 = arith.constant 0 : i32
    return %c0_i32, %c0_i32_0 : i32, i32
  }
  func.func @transform_10(%arg0: i32) -> (i32, i32) {
    %c0_i32 = arith.constant 0 : i32
    %c0_i32_0 = arith.constant 0 : i32
    %c0_i32_1 = arith.constant 0 : i32
    return %c0_i32, %c0_i32_0 : i32, i32
  }
  func.func @transform_11(%arg0: i32) -> (i32, i32) {
    %c0_i32 = arith.constant 0 : i32
    %c0_i32_0 = arith.constant 0 : i32
    %c0_i32_1 = arith.constant 0 : i32
    return %c0_i32, %c0_i32_0 : i32, i32
  }
  func.func @transform_12(%arg0: i32) -> (i32, i32) {
    %c0_i32 = arith.constant 0 : i32
    %c0_i32_0 = arith.constant 0 : i32
    %c0_i32_1 = arith.constant 0 : i32
    return %c0_i32, %c0_i32_0 : i32, i32
  }
  func.func @transform_13(%arg0: i32) -> (i32, i32) {
    %c0_i32 = arith.constant 0 : i32
    %c0_i32_0 = arith.constant 0 : i32
    return %arg0, %c0_i32 : i32, i32
  }
}

</mosaic_0001>

<llo_original>
// kernel: tpu_custom_call.1
$region0: #{tpu_custom_call.1}
  #allocation0 [shape = 'u32[]', space=smem, size = 0x4, offset = 0x4, fixed_abs, tag = 'smem constant byte address 0x4 - core index']
  #allocation1 [shape = 'u32[72,128]{1,0:T(1,128)}', space=vmem, size = 0x9000, scoped, tag = 'internal scratch']
  %s0 = inlined_call_operand.hbm [shape: bf16[24,32], index: 0, kind: input, shape index: {}]
  %s1 = inlined_call_operand.hbm [shape: bf16[32,128], index: 1, kind: input, shape index: {}]
  %s2 = inlined_call_operand.hbm [shape: bf16[128,128], index: 2, kind: input, shape index: {}]
  %s3 = inlined_call_operand.hbm [shape: bf16[128,128], index: 3, kind: input, shape index: {}]
  %s4 = inlined_call_operand.hbm [shape: bf16[128,128], index: 4, kind: input, shape index: {}]
  %s5 = inlined_call_operand.hbm [shape: bf16[128,128], index: 5, kind: input, shape index: {}]
  %s6 = inlined_call_operand.hbm [shape: bf16[128,128], index: 6, kind: input, shape index: {}]
  %s7 = inlined_call_operand.vmem [shape: f32[1,128], index: 7, kind: input, shape index: {}]
  %s8 = inlined_call_operand.vmem [shape: f32[1,128], index: 8, kind: input, shape index: {}]
  %s9 = inlined_call_operand.vmem [shape: f32[1,128], index: 9, kind: input, shape index: {}]
  %s10 = inlined_call_operand.vmem [shape: f32[1,128], index: 10, kind: input, shape index: {}]
  %s11 = inlined_call_operand.vmem [shape: f32[1,128], index: 11, kind: input, shape index: {}]
  %s12 = inlined_call_operand.vmem [shape: f32[1,128], index: 12, kind: input, shape index: {}]
  %s13 = inlined_call_operand.hbm [shape: f32[24,128], index: 13, kind: output, shape index: {}]
  %s14 = sld [smem:[#allocation0]]
  $region113: #{tpu_custom_call.1} parent=0
    _
  %s16 = ssub.s32 1, %s14
  %s17 = scalar_select 0, %s16, %s14
  $region1: #{tpu_custom_call.1} parent=0
    #allocation2 [shape = 'u8[4096]{0}', space=vmem, size = 0x1000, scoped, tag = 'input window, operand 0']
    #allocation3 [shape = 's32[2]{0}', space=sflag, size = 0x8, scoped, tag = 'scoped memory for tpu_custom_call.1']
    #allocation4 [shape = 's32[2]{0}', space=sflag, size = 0x8, scoped, tag = 'scoped memory for tpu_custom_call.1']
    #allocation5 [shape = 'u8[8192]{0}', space=vmem, size = 0x2000, scoped, tag = 'input window, operand 1, single buffered']
    #allocation6 [shape = 's32[1]{0}', space=sflag, size = 0x4, scoped, tag = 'scoped memory for tpu_custom_call.1']
    #allocation7 [shape = 'u8[32768]{0}', space=vmem, size = 0x8000, scoped, tag = 'input window, operand 2, single buffered']
    #allocation8 [shape = 'u8[32768]{0}', space=vmem, size = 0x8000, scoped, tag = 'input window, operand 3, single buffered']
    #allocation9 [shape = 's32[1]{0}', space=sflag, size = 0x4, scoped, tag = 'scoped memory for tpu_custom_call.1']
    #allocation10 [shape = 'u8[32768]{0}', space=vmem, size = 0x8000, scoped, tag = 'input window, operand 4, single buffered']
    #allocation11 [shape = 'u8[32768]{0}', space=vmem, size = 0x8000, scoped, tag = 'input window, operand 5, single buffered']
    #allocation12 [shape = 's32[1]{0}', space=sflag, size = 0x4, scoped, tag = 'scoped memory for tpu_custom_call.1']
    #allocation13 [shape = 'u8[32768]{0}', space=vmem, size = 0x8000, scoped, tag = 'input window, operand 6, single buffered']
    #allocation14 [shape = 'u8[8192]{0}', space=vmem, size = 0x2000, scoped, tag = 'output window, operand 0']
    %18 = vsyncpa [#allocation3], 0
    %s19 = scalar_lea.sflag [#allocation3], 1
    %20 = vsyncpa %s19, 0
    %21 = vsyncpa [#allocation6], 0
    %22 = vsyncpa [#allocation9], 0
    %23 = vsyncpa [#allocation12], 0
    %24 = vsyncpa [#allocation4], 0
    %s25 = scalar_lea.sflag [#allocation4], 1
    %26 = vsyncpa %s25, 0
    loop: start=0, step=1, limit=5
    $region2: #{tpu_custom_call.1} parent=1 // loop_pre_header
      _
    $region3: #{tpu_custom_call.1} parent=1 // loop_header
      %s28 = sphi 0, %s32
      %p29 = scmp.ge.s32.totalorder %s28, 5
      %s38 = sphi 0, %s40
      %s41 = sphi 0, %s38
      %s42 = sphi 0, %s41
      %s58 = sphi 0, %s42
      %s62 = sphi 0, %s62
      %s64 = sphi 0, %s62
      %s65 = sphi 0, %s64
      %s79 = sphi 0, %s65
      %s83 = sphi 0, %s83
      %s85 = sphi 0, %s83
      %s86 = sphi 0, %s85
      %s100 = sphi 0, %s86
      %s104 = sphi 0, %s104
      %s106 = sphi 0, %s104
      %s107 = sphi 0, %s106
      %s121 = sphi 0, %s107
      %s125 = sphi 0, %s125
      %s127 = sphi 0, %s125
      %s128 = sphi 0, %s127
      %s142 = sphi 0, %s128
      %s146 = sphi 0, %s146
      %s148 = sphi 0, %s146
      %s149 = sphi 0, %s148
      %s163 = sphi 0, %s149
      %s167 = sphi 0, %s167
      %s169 = sphi 0, %s167
      %s170 = sphi 0, %s169
      %s184 = sphi 0, %s170
      %s188 = sphi 0, %s188
      %s190 = sphi 0, %s188
      %s191 = sphi 0, %s190
      %s205 = sphi 0, %s191
      %s209 = sphi 0, %s209
      %s211 = sphi 0, %s209
      %s212 = sphi 0, %s211
      %s226 = sphi 0, %s212
      %s230 = sphi 0, %s230
      %s232 = sphi 0, %s230
      %s233 = sphi 0, %s232
      %s247 = sphi 0, %s233
      %s251 = sphi 0, %s251
      %s253 = sphi 0, %s251
      %s254 = sphi 0, %s253
      %s268 = sphi 0, %s254
      %s272 = sphi 0, %s272
      %s274 = sphi 0, %s272
      %s275 = sphi 0, %s274
      %s289 = sphi 0, %s275
      %s293 = sphi 0, %s293
      %s295 = sphi 0, %s293
      %s296 = sphi 0, %s295
      %s310 = sphi 0, %s296
      %s316 = sphi 0, %s318
      %s319 = sphi 0, %s316
      %s320 = sphi 0, %s319
      %s336 = sphi 0, %s320
    $region4: #{tpu_custom_call.1} parent=1 // loop_header_branch
      %31 = sbr.rel (%p29) target = $region8
    $region5: #{tpu_custom_call.1} parent=1 // loop_body
      %s33 = ssub.s32 %s28, 1
      %s34 = ssub.s32 %s28, 2
      %s35 = sadd.s32 %s28, 1
      %s36 = ssub.s32 %s28, %s35
      %p37 = scmp.eq.s32.totalorder %s36, 0
      %s39 = sadd.s32 %s38, 1
      %s40 = scalar_select %p37, %s38, %s39
      %p43 = pneg %p37
      %p44 = scmp.eq.s32.totalorder %s28, 2
      %p45 = por %p43, %p44
      %p46 = scmp.ne.s32.totalorder %s38, %s41
      %p47 = scmp.eq.s32.totalorder %s28, 0
      %p48 = por %p46, %p47
      %p49 = scmp.ne.s32.totalorder %s38, %s41
      %p50 = scmp.eq.s32.totalorder %s33, 2
      %p51 = por %p49, %p50
      %p52 = scmp.ne.s32.totalorder %s41, %s42
      %p53 = scmp.eq.s32.totalorder %s33, 0
      %p54 = por %p52, %p53
      %p55 = scmp.ne.s32.totalorder %s41, %s42
      %p56 = scmp.eq.s32.totalorder %s34, 2
      %p57 = por %p55, %p56
      %p59 = scmp.ne.s32.totalorder %s42, %s58
      %p60 = scmp.eq.s32.totalorder %s34, 0
      %p61 = por %p59, %p60
      %s63 = sadd.s32 %s62, 1
      %p66 = scmp.eq.s32.totalorder %s28, 2
      %p67 = scmp.ne.s32.totalorder %s62, %s64
      %p68 = scmp.eq.s32.totalorder %s28, 0
      %p69 = por %p67, %p68
      %p70 = scmp.ne.s32.totalorder %s62, %s64
      %p71 = scmp.eq.s32.totalorder %s33, 2
      %p72 = por %p70, %p71
      %p73 = scmp.ne.s32.totalorder %s64, %s65
      %p74 = scmp.eq.s32.totalorder %s33, 0
      %p75 = por %p73, %p74
      %p76 = scmp.ne.s32.totalorder %s64, %s65
      %p77 = scmp.eq.s32.totalorder %s34, 2
      %p78 = por %p76, %p77
      %p80 = scmp.ne.s32.totalorder %s65, %s79
      %p81 = scmp.eq.s32.totalorder %s34, 0
      %p82 = por %p80, %p81
      %s84 = sadd.s32 %s83, 1
      %p87 = scmp.eq.s32.totalorder %s28, 2
      %p88 = scmp.ne.s32.totalorder %s83, %s85
      %p89 = scmp.eq.s32.totalorder %s28, 0
      %p90 = por %p88, %p89
      %p91 = scmp.ne.s32.totalorder %s83, %s85
      %p92 = scmp.eq.s32.totalorder %s33, 2
      %p93 = por %p91, %p92
      %p94 = scmp.ne.s32.totalorder %s85, %s86
      %p95 = scmp.eq.s32.totalorder %s33, 0
      %p96 = por %p94, %p95
      %p97 = scmp.ne.s32.totalorder %s85, %s86
      %p98 = scmp.eq.s32.totalorder %s34, 2
      %p99 = por %p97, %p98
      %p101 = scmp.ne.s32.totalorder %s86, %s100
      %p102 = scmp.eq.s32.totalorder %s34, 0
      %p103 = por %p101, %p102
      %s105 = sadd.s32 %s104, 1
      %p108 = scmp.eq.s32.totalorder %s28, 2
      %p109 = scmp.ne.s32.totalorder %s104, %s106
      %p110 = scmp.eq.s32.totalorder %s28, 0
      %p111 = por %p109, %p110
      %p112 = scmp.ne.s32.totalorder %s104, %s106
      %p113 = scmp.eq.s32.totalorder %s33, 2
      %p114 = por %p112, %p113
      %p115 = scmp.ne.s32.totalorder %s106, %s107
      %p116 = scmp.eq.s32.totalorder %s33, 0
      %p117 = por %p115, %p116
      %p118 = scmp.ne.s32.totalorder %s106, %s107
      %p119 = scmp.eq.s32.totalorder %s34, 2
      %p120 = por %p118, %p119
      %p122 = scmp.ne.s32.totalorder %s107, %s121
      %p123 = scmp.eq.s32.totalorder %s34, 0
      %p124 = por %p122, %p123
      %s126 = sadd.s32 %s125, 1
      %p129 = scmp.eq.s32.totalorder %s28, 2
      %p130 = scmp.ne.s32.totalorder %s125, %s127
      %p131 = scmp.eq.s32.totalorder %s28, 0
      %p132 = por %p130, %p131
      %p133 = scmp.ne.s32.totalorder %s125, %s127
      %p134 = scmp.eq.s32.totalorder %s33, 2
      %p135 = por %p133, %p134
      %p136 = scmp.ne.s32.totalorder %s127, %s128
      %p137 = scmp.eq.s32.totalorder %s33, 0
      %p138 = por %p136, %p137
      %p139 = scmp.ne.s32.totalorder %s127, %s128
      %p140 = scmp.eq.s32.totalorder %s34, 2
      %p141 = por %p139, %p140
      %p143 = scmp.ne.s32.totalorder %s128, %s142
      %p144 = scmp.eq.s32.totalorder %s34, 0
      %p145 = por %p143, %p144
      %s147 = sadd.s32 %s146, 1
      %p150 = scmp.eq.s32.totalorder %s28, 2
      %p151 = scmp.ne.s32.totalorder %s146, %s148
      %p152 = scmp.eq.s32.totalorder %s28, 0
      %p153 = por %p151, %p152
      %p154 = scmp.ne.s32.totalorder %s146, %s148
      %p155 = scmp.eq.s32.totalorder %s33, 2
      %p156 = por %p154, %p155
      %p157 = scmp.ne.s32.totalorder %s148, %s149
      %p158 = scmp.eq.s32.totalorder %s33, 0
      %p159 = por %p157, %p158
      %p160 = scmp.ne.s32.totalorder %s148, %s149
      %p161 = scmp.eq.s32.totalorder %s34, 2
      %p162 = por %p160, %p161
      %p164 = scmp.ne.s32.totalorder %s149, %s163
      %p165 = scmp.eq.s32.totalorder %s34, 0
      %p166 = por %p164, %p165
      %s168 = sadd.s32 %s167, 1
      %p171 = scmp.eq.s32.totalorder %s28, 2
      %p172 = scmp.ne.s32.totalorder %s167, %s169
      %p173 = scmp.eq.s32.totalorder %s28, 0
      %p174 = por %p172, %p173
      %p175 = scmp.ne.s32.totalorder %s167, %s169
      %p176 = scmp.eq.s32.totalorder %s33, 2
      %p177 = por %p175, %p176
      %p178 = scmp.ne.s32.totalorder %s169, %s170
      %p179 = scmp.eq.s32.totalorder %s33, 0
      %p180 = por %p178, %p179
      %p181 = scmp.ne.s32.totalorder %s169, %s170
      %p182 = scmp.eq.s32.totalorder %s34, 2
      %p183 = por %p181, %p182
      %p185 = scmp.ne.s32.totalorder %s170, %s184
      %p186 = scmp.eq.s32.totalorder %s34, 0
      %p187 = por %p185, %p186
      %s189 = sadd.s32 %s188, 1
      %p192 = scmp.eq.s32.totalorder %s28, 2
      %p193 = scmp.ne.s32.totalorder %s188, %s190
      %p194 = scmp.eq.s32.totalorder %s28, 0
      %p195 = por %p193, %p194
      %p196 = scmp.ne.s32.totalorder %s188, %s190
      %p197 = scmp.eq.s32.totalorder %s33, 2
      %p198 = por %p196, %p197
      %p199 = scmp.ne.s32.totalorder %s190, %s191
      %p200 = scmp.eq.s32.totalorder %s33, 0
      %p201 = por %p199, %p200
      %p202 = scmp.ne.s32.totalorder %s190, %s191
      %p203 = scmp.eq.s32.totalorder %s34, 2
      %p204 = por %p202, %p203
      %p206 = scmp.ne.s32.totalorder %s191, %s205
      %p207 = scmp.eq.s32.totalorder %s34, 0
      %p208 = por %p206, %p207
      %s210 = sadd.s32 %s209, 1
      %p213 = scmp.eq.s32.totalorder %s28, 2
      %p214 = scmp.ne.s32.totalorder %s209, %s211
      %p215 = scmp.eq.s32.totalorder %s28, 0
      %p216 = por %p214, %p215
      %p217 = scmp.ne.s32.totalorder %s209, %s211
      %p218 = scmp.eq.s32.totalorder %s33, 2
      %p219 = por %p217, %p218
      %p220 = scmp.ne.s32.totalorder %s211, %s212
      %p221 = scmp.eq.s32.totalorder %s33, 0
      %p222 = por %p220, %p221
      %p223 = scmp.ne.s32.totalorder %s211, %s212
      %p224 = scmp.eq.s32.totalorder %s34, 2
      %p225 = por %p223, %p224
      %p227 = scmp.ne.s32.totalorder %s212, %s226
      %p228 = scmp.eq.s32.totalorder %s34, 0
      %p229 = por %p227, %p228
      %s231 = sadd.s32 %s230, 1
      %p234 = scmp.eq.s32.totalorder %s28, 2
      %p235 = scmp.ne.s32.totalorder %s230, %s232
      %p236 = scmp.eq.s32.totalorder %s28, 0
      %p237 = por %p235, %p236
      %p238 = scmp.ne.s32.totalorder %s230, %s232
      %p239 = scmp.eq.s32.totalorder %s33, 2
      %p240 = por %p238, %p239
      %p241 = scmp.ne.s32.totalorder %s232, %s233
      %p242 = scmp.eq.s32.totalorder %s33, 0
      %p243 = por %p241, %p242
      %p244 = scmp.ne.s32.totalorder %s232, %s233
      %p245 = scmp.eq.s32.totalorder %s34, 2
      %p246 = por %p244, %p245
      %p248 = scmp.ne.s32.totalorder %s233, %s247
      %p249 = scmp.eq.s32.totalorder %s34, 0
      %p250 = por %p248, %p249
      %s252 = sadd.s32 %s251, 1
      %p255 = scmp.eq.s32.totalorder %s28, 2
      %p256 = scmp.ne.s32.totalorder %s251, %s253
      %p257 = scmp.eq.s32.totalorder %s28, 0
      %p258 = por %p256, %p257
      %p259 = scmp.ne.s32.totalorder %s251, %s253
      %p260 = scmp.eq.s32.totalorder %s33, 2
      %p261 = por %p259, %p260
      %p262 = scmp.ne.s32.totalorder %s253, %s254
      %p263 = scmp.eq.s32.totalorder %s33, 0
      %p264 = por %p262, %p263
      %p265 = scmp.ne.s32.totalorder %s253, %s254
      %p266 = scmp.eq.s32.totalorder %s34, 2
      %p267 = por %p265, %p266
      %p269 = scmp.ne.s32.totalorder %s254, %s268
      %p270 = scmp.eq.s32.totalorder %s34, 0
      %p271 = por %p269, %p270
      %s273 = sadd.s32 %s272, 1
      %p276 = scmp.eq.s32.totalorder %s28, 2
      %p277 = scmp.ne.s32.totalorder %s272, %s274
      %p278 = scmp.eq.s32.totalorder %s28, 0
      %p279 = por %p277, %p278
      %p280 = scmp.ne.s32.totalorder %s272, %s274
      %p281 = scmp.eq.s32.totalorder %s33, 2
      %p282 = por %p280, %p281
      %p283 = scmp.ne.s32.totalorder %s274, %s275
      %p284 = scmp.eq.s32.totalorder %s33, 0
      %p285 = por %p283, %p284
      %p286 = scmp.ne.s32.totalorder %s274, %s275
      %p287 = scmp.eq.s32.totalorder %s34, 2
      %p288 = por %p286, %p287
      %p290 = scmp.ne.s32.totalorder %s275, %s289
      %p291 = scmp.eq.s32.totalorder %s34, 0
      %p292 = por %p290, %p291
      %s294 = sadd.s32 %s293, 1
      %p297 = scmp.eq.s32.totalorder %s28, 2
      %p298 = scmp.ne.s32.totalorder %s293, %s295
      %p299 = scmp.eq.s32.totalorder %s28, 0
      %p300 = por %p298, %p299
      %p301 = scmp.ne.s32.totalorder %s293, %s295
      %p302 = scmp.eq.s32.totalorder %s33, 2
      %p303 = por %p301, %p302
      %p304 = scmp.ne.s32.totalorder %s295, %s296
      %p305 = scmp.eq.s32.totalorder %s33, 0
      %p306 = por %p304, %p305
      %p307 = scmp.ne.s32.totalorder %s295, %s296
      %p308 = scmp.eq.s32.totalorder %s34, 2
      %p309 = por %p307, %p308
      %p311 = scmp.ne.s32.totalorder %s296, %s310
      %p312 = scmp.eq.s32.totalorder %s34, 0
      %p313 = por %p311, %p312
      %s314 = ssub.s32 %s28, %s35
      %p315 = scmp.eq.s32.totalorder %s314, 0
      %s317 = sadd.s32 %s316, 1
      %s318 = scalar_select %p315, %s316, %s317
      %p321 = pneg %p315
      %p322 = scmp.eq.s32.totalorder %s28, 2
      %p323 = por %p321, %p322
      %p324 = scmp.ne.s32.totalorder %s316, %s319
      %p325 = scmp.eq.s32.totalorder %s28, 0
      %p326 = por %p324, %p325
      %p327 = scmp.ne.s32.totalorder %s316, %s319
      %p328 = scmp.eq.s32.totalorder %s33, 2
      %p329 = por %p327, %p328
      %p330 = scmp.ne.s32.totalorder %s319, %s320
      %p331 = scmp.eq.s32.totalorder %s33, 0
      %p332 = por %p330, %p331
      %p333 = scmp.ne.s32.totalorder %s319, %s320
      %p334 = scmp.eq.s32.totalorder %s34, 2
      %p335 = por %p333, %p334
      %p337 = scmp.ne.s32.totalorder %s320, %s336
      %p338 = scmp.eq.s32.totalorder %s34, 0
      %p339 = por %p337, %p338
      %p340 = scmp.le.s32.totalorder 1, %s28
      %p341 = scmp.lt.s32.totalorder %s28, 4
      %p342 = pnand %p340, %p341
      %p343 = pneg %p342
      // Predicated region
      $region9: #{tpu_custom_call.1} parent=5 // pred_check
        _
      $region10: #{tpu_custom_call.1} parent=5 // pred_check_branch
        %345 = sbr.rel (%p342) target = $region12
      $region11: #{tpu_custom_call.1} parent=5 // pred_region
        %s346 = ssub.s32 %s28, 1
        // Predicated region
        $region13: #{tpu_custom_call.1} parent=11 // pred_check
          %p347 = pneg %p75
        $region14: #{tpu_custom_call.1} parent=11 // pred_check_branch
          %349 = sbr.rel (%p347) target = $region16
        $region15: #{tpu_custom_call.1} parent=11 // pred_region
          %351 = vsyncadd [#allocation6], 0
          %s352 = sshll.u32 %s1, 4
          %s353 = int_to_ptr.hbm [resolvable:$true] %s352
          %s354 = sshll.u32 [#allocation5], 4
          %s355 = int_to_ptr.vmem [resolvable:$true] %s354
          %360 = dma.hbm_to_vmem [thread:$0]  %s353, 256, %s355, [#allocation6], 64, 64, 4
        $region16: #{tpu_custom_call.1} parent=11 // pred_fallthru
          _
        // Predicated region
        $region17: #{tpu_custom_call.1} parent=11 // pred_check
          %p361 = pneg %p96
        $region18: #{tpu_custom_call.1} parent=11 // pred_check_branch
          %363 = sbr.rel (%p361) target = $region20
        $region19: #{tpu_custom_call.1} parent=11 // pred_region
          %365 = vsyncadd [#allocation6], 0
          %s366 = sshll.u32 %s2, 4
          %s367 = int_to_ptr.hbm [resolvable:$true] %s366
          %s368 = sshll.u32 [#allocation7], 4
          %s369 = int_to_ptr.vmem [resolvable:$true] %s368
          %374 = dma.hbm_to_vmem [thread:$0]  %s367, 1024, %s369, [#allocation6], 64, 64, 4
        $region20: #{tpu_custom_call.1} parent=11 // pred_fallthru
          _
        // Predicated region
        $region21: #{tpu_custom_call.1} parent=11 // pred_check
          %p375 = pneg %p117
        $region22: #{tpu_custom_call.1} parent=11 // pred_check_branch
          %377 = sbr.rel (%p375) target = $region24
        $region23: #{tpu_custom_call.1} parent=11 // pred_region
          %379 = vsyncadd [#allocation9], 0
          %s380 = sshll.u32 %s3, 4
          %s381 = int_to_ptr.hbm [resolvable:$true] %s380
          %s382 = sshll.u32 [#allocation8], 4
          %s383 = int_to_ptr.vmem [resolvable:$true] %s382
          %388 = dma.hbm_to_vmem [thread:$0]  %s381, 1024, %s383, [#allocation9], 64, 64, 4
        $region24: #{tpu_custom_call.1} parent=11 // pred_fallthru
          _
        // Predicated region
        $region25: #{tpu_custom_call.1} parent=11 // pred_check
          %p389 = pneg %p138
        $region26: #{tpu_custom_call.1} parent=11 // pred_check_branch
          %391 = sbr.rel (%p389) target = $region28
        $region27: #{tpu_custom_call.1} parent=11 // pred_region
          %393 = vsyncadd [#allocation9], 0
          %s394 = sshll.u32 %s4, 4
          %s395 = int_to_ptr.hbm [resolvable:$true] %s394
          %s396 = sshll.u32 [#allocation10], 4
          %s397 = int_to_ptr.vmem [resolvable:$true] %s396
          %402 = dma.hbm_to_vmem [thread:$0]  %s395, 1024, %s397, [#allocation9], 64, 64, 4
        $region28: #{tpu_custom_call.1} parent=11 // pred_fallthru
          _
        // Predicated region
        $region29: #{tpu_custom_call.1} parent=11 // pred_check
          %p403 = pneg %p159
        $region30: #{tpu_custom_call.1} parent=11 // pred_check_branch
          %405 = sbr.rel (%p403) target = $region32
        $region31: #{tpu_custom_call.1} parent=11 // pred_region
          %407 = vsyncadd [#allocation12], 0
          %s408 = sshll.u32 %s5, 4
          %s409 = int_to_ptr.hbm [resolvable:$true] %s408
          %s410 = sshll.u32 [#allocation11], 4
          %s411 = int_to_ptr.vmem [resolvable:$true] %s410
          %416 = dma.hbm_to_vmem [thread:$0]  %s409, 1024, %s411, [#allocation12], 64, 64, 4
        $region32: #{tpu_custom_call.1} parent=11 // pred_fallthru
          _
        // Predicated region
        $region33: #{tpu_custom_call.1} parent=11 // pred_check
          %p417 = pneg %p180
        $region34: #{tpu_custom_call.1} parent=11 // pred_check_branch
          %419 = sbr.rel (%p417) target = $region36
        $region35: #{tpu_custom_call.1} parent=11 // pred_region
          %421 = vsyncadd [#allocation12], 0
          %s422 = sshll.u32 %s6, 4
          %s423 = int_to_ptr.hbm [resolvable:$true] %s422
          %s424 = sshll.u32 [#allocation13], 4
          %s425 = int_to_ptr.vmem [resolvable:$true] %s424
          %430 = dma.hbm_to_vmem [thread:$0]  %s423, 1024, %s425, [#allocation12], 64, 64, 4
        $region36: #{tpu_custom_call.1} parent=11 // pred_fallthru
          _
        // Predicated region
        $region37: #{tpu_custom_call.1} parent=11 // pred_check
          %p431 = pneg %p201
        $region38: #{tpu_custom_call.1} parent=11 // pred_check_branch
          %433 = sbr.rel (%p431) target = $region40
        $region39: #{tpu_custom_call.1} parent=11 // pred_region
          _
        $region40: #{tpu_custom_call.1} parent=11 // pred_fallthru
          _
        // Predicated region
        $region41: #{tpu_custom_call.1} parent=11 // pred_check
          %p434 = pneg %p222
        $region42: #{tpu_custom_call.1} parent=11 // pred_check_branch
          %436 = sbr.rel (%p434) target = $region44
        $region43: #{tpu_custom_call.1} parent=11 // pred_region
          _
        $region44: #{tpu_custom_call.1} parent=11 // pred_fallthru
          _
        // Predicated region
        $region45: #{tpu_custom_call.1} parent=11 // pred_check
          %p437 = pneg %p243
        $region46: #{tpu_custom_call.1} parent=11 // pred_check_branch
          %439 = sbr.rel (%p437) target = $region48
        $region47: #{tpu_custom_call.1} parent=11 // pred_region
          _
        $region48: #{tpu_custom_call.1} parent=11 // pred_fallthru
          _
        // Predicated region
        $region49: #{tpu_custom_call.1} parent=11 // pred_check
          %p440 = pneg %p264
        $region50: #{tpu_custom_call.1} parent=11 // pred_check_branch
          %442 = sbr.rel (%p440) target = $region52
        $region51: #{tpu_custom_call.1} parent=11 // pred_region
          _
        $region52: #{tpu_custom_call.1} parent=11 // pred_fallthru
          _
        // Predicated region
        $region53: #{tpu_custom_call.1} parent=11 // pred_check
          %p443 = pneg %p285
        $region54: #{tpu_custom_call.1} parent=11 // pred_check_branch
          %445 = sbr.rel (%p443) target = $region56
        $region55: #{tpu_custom_call.1} parent=11 // pred_region
          _
        $region56: #{tpu_custom_call.1} parent=11 // pred_fallthru
          _
        // Predicated region
        $region57: #{tpu_custom_call.1} parent=11 // pred_check
          %p446 = pneg %p306
        $region58: #{tpu_custom_call.1} parent=11 // pred_check_branch
          %448 = sbr.rel (%p446) target = $region60
        $region59: #{tpu_custom_call.1} parent=11 // pred_region
          _
        $region60: #{tpu_custom_call.1} parent=11 // pred_fallthru
          _
      $region12: #{tpu_custom_call.1} parent=5 // pred_fallthru
        _
      %p449 = scmp.lt.s32.totalorder %s28, 3
      // Predicated region
      $region61: #{tpu_custom_call.1} parent=5 // pred_check
        %p450 = pneg %p449
      $region62: #{tpu_custom_call.1} parent=5 // pred_check_branch
        %452 = sbr.rel (%p450) target = $region64
      $region63: #{tpu_custom_call.1} parent=5 // pred_region
        // Predicated region
        $region65: #{tpu_custom_call.1} parent=63 // pred_check
          %p453 = pneg %p48
        $region66: #{tpu_custom_call.1} parent=63 // pred_check_branch
          %455 = sbr.rel (%p453) target = $region68
        $region67: #{tpu_custom_call.1} parent=63 // pred_region
          %s456 = sand.u32 %s38, 1
          %s457 = scalar_lea.sflag [#allocation3], %s456
          %s458 = sand.u32 %s38, 1
          %s459 = smul.addr %s458, 4
          %s460 = scalar_lea.vmem [#allocation2], %s459
          %462 = vsyncadd %s457, 0
          %s463 = smul.addr %s28, 4
          %s464 = scalar_lea.hbm %s0, %s463
          %s466 = sshll.u32 %s464, 4
          %s467 = int_to_ptr.hbm [resolvable:$true] %s466
          %s468 = sshll.u32 %s460, 4
          %s469 = int_to_ptr.vmem [resolvable:$true] %s468
          %471 = dma.hbm_to_vmem [thread:$0]  %s467, 64, %s469, %s457
        $region68: #{tpu_custom_call.1} parent=63 // pred_fallthru
          _
      $region64: #{tpu_custom_call.1} parent=5 // pred_fallthru
        _
      %p472 = scmp.le.s32.totalorder 1, %s28
      %p473 = scmp.lt.s32.totalorder %s28, 4
      %p474 = pnand %p472, %p473
      %p475 = pneg %p474
      // Predicated region
      $region69: #{tpu_custom_call.1} parent=5 // pred_check
        _
      $region70: #{tpu_custom_call.1} parent=5 // pred_check_branch
        %477 = sbr.rel (%p474) target = $region72
      $region71: #{tpu_custom_call.1} parent=5 // pred_region
        %s478 = ssub.s32 %s28, 1
        %s479 = sand.u32 %s41, 1
        %s480 = scalar_lea.sflag [#allocation3], %s479
        %s481 = sand.u32 %s41, 1
        %s482 = smul.addr %s481, 4
        %s483 = scalar_lea.vmem [#allocation2], %s482
        // Predicated region
        $region73: #{tpu_custom_call.1} parent=71 // pred_check
          %p484 = pneg %p54
        $region74: #{tpu_custom_call.1} parent=71 // pred_check_branch
          %486 = sbr.rel (%p484) target = $region76
        $region75: #{tpu_custom_call.1} parent=71 // pred_region
          %488 = dma.done %s480, 64
        $region76: #{tpu_custom_call.1} parent=71 // pred_fallthru
          _
        // Predicated region
        $region77: #{tpu_custom_call.1} parent=71 // pred_check
          %p489 = pneg %p75
        $region78: #{tpu_custom_call.1} parent=71 // pred_check_branch
          %491 = sbr.rel (%p489) target = $region80
        $region79: #{tpu_custom_call.1} parent=71 // pred_region
          %493 = dma.done [#allocation6], 256
        $region80: #{tpu_custom_call.1} parent=71 // pred_fallthru
          _
        // Predicated region
        $region81: #{tpu_custom_call.1} parent=71 // pred_check
          %p494 = pneg %p96
        $region82: #{tpu_custom_call.1} parent=71 // pred_check_branch
          %496 = sbr.rel (%p494) target = $region84
        $region83: #{tpu_custom_call.1} parent=71 // pred_region
          %498 = dma.done [#allocation6], 1024
        $region84: #{tpu_custom_call.1} parent=71 // pred_fallthru
          _
        // Predicated region
        $region85: #{tpu_custom_call.1} parent=71 // pred_check
          %p499 = pneg %p117
        $region86: #{tpu_custom_call.1} parent=71 // pred_check_branch
          %501 = sbr.rel (%p499) target = $region88
        $region87: #{tpu_custom_call.1} parent=71 // pred_region
          %503 = dma.done [#allocation9], 1024
        $region88: #{tpu_custom_call.1} parent=71 // pred_fallthru
          _
        // Predicated region
        $region89: #{tpu_custom_call.1} parent=71 // pred_check
          %p504 = pneg %p138
        $region90: #{tpu_custom_call.1} parent=71 // pred_check_branch
          %506 = sbr.rel (%p504) target = $region92
        $region91: #{tpu_custom_call.1} parent=71 // pred_region
          %508 = dma.done [#allocation9], 1024
        $region92: #{tpu_custom_call.1} parent=71 // pred_fallthru
          _
        // Predicated region
        $region93: #{tpu_custom_call.1} parent=71 // pred_check
          %p509 = pneg %p159
        $region94: #{tpu_custom_call.1} parent=71 // pred_check_branch
          %511 = sbr.rel (%p509) target = $region96
        $region95: #{tpu_custom_call.1} parent=71 // pred_region
          %513 = dma.done [#allocation12], 1024
        $region96: #{tpu_custom_call.1} parent=71 // pred_fallthru
          _
        // Predicated region
        $region97: #{tpu_custom_call.1} parent=71 // pred_check
          %p514 = pneg %p180
        $region98: #{tpu_custom_call.1} parent=71 // pred_check_branch
          %516 = sbr.rel (%p514) target = $region100
        $region99: #{tpu_custom_call.1} parent=71 // pred_region
          %518 = dma.done [#allocation12], 1024
        $region100: #{tpu_custom_call.1} parent=71 // pred_fallthru
          _
        %s519 = sand.u32 %s41, 1
        %s520 = scalar_lea.sflag [#allocation3], %s519
        %s521 = sand.u32 %s41, 1
        %s522 = smul.addr %s521, 4
        %s523 = scalar_lea.vmem [#allocation2], %s522
        %p524 = pneg %p54
        %p525 = pneg %p51
        %p526 = pneg %p75
        %p527 = pneg %p72
        %p528 = pneg %p96
        %p529 = pneg %p93
        %p530 = pneg %p117
        %p531 = pneg %p114
        %p532 = pneg %p138
        %p533 = pneg %p135
        %p534 = pneg %p159
        %p535 = pneg %p156
        %p536 = pneg %p180
        %p537 = pneg %p177
        %p538 = pneg %p201
        %p539 = pneg %p198
        %p540 = pneg %p222
        %p541 = pneg %p219
        %p542 = pneg %p243
        %p543 = pneg %p240
        %p544 = pneg %p264
        %p545 = pneg %p261
        %p546 = pneg %p285
        %p547 = pneg %p282
        %p548 = pneg %p306
        %p549 = pneg %p303
        %p550 = pneg %p332
        %p551 = pneg %p329
        %s552 = sand.u32 %s319, 1
        %s553 = scalar_lea.sflag [#allocation4], %s552
        %s554 = sand.u32 %s319, 1
        %s555 = smul.addr %s554, 8
        %s556 = scalar_lea.vmem [#allocation14], %s555
        %v558 = vld [vmem:[%s483] sm:$0xf]
        %v559 = vld [vmem:[#allocation5] sm:$0xf]
        %v560 = vld [vmem:[#allocation5 + $0x4] sm:$0xf]
        %v561 = vld [vmem:[#allocation5 + $0x8] sm:$0xf]
        %v562 = vld [vmem:[#allocation5 + $0xc] sm:$0xf]
        %v563 = vld [vmem:[%s7] sm:$0x1]
        %v565 = vperm.slane %v563, 0
        %v571 = vunpack.c.l.b16 %v559
        %v572 = vunpack.c.l.b16 %v560
        %v573 = vunpack.c.l.b16 %v561
        %v574 = vunpack.c.l.b16 %v562
        %v575 = vpack.c.b16 %v572, %v571
        %v576 = vpack.c.b16 %v574, %v573
        %vm579 = vcmask 261120
        %v581 = vsel %vm579, %v558, 0
        %583 = vmatpush.bf16.msra.mxu0 0
        %584 = vmatpush.bf16.msra.mxu0 0
        %585 = vmatpush.bf16.msra.mxu0 0
        %586 = vmatpush.bf16.msra.mxu0 0
        %587 = vmatpush.bf16.msra.mxu0 0
        %588 = vmatpush.bf16.msra.mxu0 0
        %589 = vmatpush.bf16.msra.mxu0 %v576
        %590 = vmatpush.bf16.msra.mxu0 %v575
        %591 = vmatmul.bf16.gmra.mxu0 %v581
        %v592 = vpop.f32.mrf.mxu0
        %v593 = vadd.f32 %v565, %v592
        %v594 = vpop.f32.mrf.mxu0
        %595 = vdwg.mxu0
        %v596 = vmax.f32 %v593, 0.0
        %v597 = vpack.c.bf16 %v596, %v596
        %v598 = vld [vmem:[#allocation7] sm:$0xf]
        %v599 = vld [vmem:[#allocation7 + $0x4] sm:$0xf]
        %v600 = vld [vmem:[#allocation7 + $0x8] sm:$0xf]
        %v601 = vld [vmem:[#allocation7 + $0xc] sm:$0xf]
        %v602 = vld [vmem:[#allocation7 + $0x10] sm:$0xf]
        %v603 = vld [vmem:[#allocation7 + $0x14] sm:$0xf]
        %v604 = vld [vmem:[#allocation7 + $0x18] sm:$0xf]
        %v605 = vld [vmem:[#allocation7 + $0x1c] sm:$0xf]
        %v606 = vld [vmem:[#allocation7 + $0x20] sm:$0xf]
        %v607 = vld [vmem:[#allocation7 + $0x24] sm:$0xf]
        %v608 = vld [vmem:[#allocation7 + $0x28] sm:$0xf]
        %v609 = vld [vmem:[#allocation7 + $0x2c] sm:$0xf]
        %v610 = vld [vmem:[#allocation7 + $0x30] sm:$0xf]
        %v611 = vld [vmem:[#allocation7 + $0x34] sm:$0xf]
        %v612 = vld [vmem:[#allocation7 + $0x38] sm:$0xf]
        %v613 = vld [vmem:[#allocation7 + $0x3c] sm:$0xf]
        %v614 = vld [vmem:[%s8] sm:$0x1]
        %v616 = vperm.slane %v614, 0
        %v634 = vunpack.c.l.b16 %v598
        %v635 = vunpack.c.l.b16 %v599
        %v636 = vunpack.c.l.b16 %v600
        %v637 = vunpack.c.l.b16 %v601
        %v638 = vunpack.c.l.b16 %v602
        %v639 = vunpack.c.l.b16 %v603
        %v640 = vunpack.c.l.b16 %v604
        %v641 = vunpack.c.l.b16 %v605
        %v642 = vunpack.c.l.b16 %v606
        %v643 = vunpack.c.l.b16 %v607
        %v644 = vunpack.c.l.b16 %v608
        %v645 = vunpack.c.l.b16 %v609
        %v646 = vunpack.c.l.b16 %v610
        %v647 = vunpack.c.l.b16 %v611
        %v648 = vunpack.c.l.b16 %v612
        %v649 = vunpack.c.l.b16 %v613
        %v650 = vpack.c.b16 %v635, %v634
        %v651 = vpack.c.b16 %v637, %v636
        %v652 = vpack.c.b16 %v639, %v638
        %v653 = vpack.c.b16 %v641, %v640
        %v654 = vpack.c.b16 %v643, %v642
        %v655 = vpack.c.b16 %v645, %v644
        %v656 = vpack.c.b16 %v647, %v646
        %v657 = vpack.c.b16 %v649, %v648
        %666 = vmatpush.bf16.msra.mxu0 %v657
        %667 = vmatpush.bf16.msra.mxu0 %v656
        %668 = vmatpush.bf16.msra.mxu0 %v655
        %669 = vmatpush.bf16.msra.mxu0 %v654
        %670 = vmatpush.bf16.msra.mxu0 %v653
        %671 = vmatpush.bf16.msra.mxu0 %v652
        %672 = vmatpush.bf16.msra.mxu0 %v651
        %673 = vmatpush.bf16.msra.mxu0 %v650
        %674 = vmatmul.bf16.gmra.mxu0 %v597
        %v675 = vpop.f32.mrf.mxu0
        %v676 = vadd.f32 %v616, %v675
        %v677 = vpop.f32.mrf.mxu0
        %678 = vdwg.mxu0
        %v679 = vmax.f32 %v676, 0.0
        %v680 = vpack.c.bf16 %v679, %v679
        %v681 = vld [vmem:[#allocation8] sm:$0xf]
        %v682 = vld [vmem:[#allocation8 + $0x4] sm:$0xf]
        %v683 = vld [vmem:[#allocation8 + $0x8] sm:$0xf]
        %v684 = vld [vmem:[#allocation8 + $0xc] sm:$0xf]
        %v685 = vld [vmem:[#allocation8 + $0x10] sm:$0xf]
        %v686 = vld [vmem:[#allocation8 + $0x14] sm:$0xf]
        %v687 = vld [vmem:[#allocation8 + $0x18] sm:$0xf]
        %v688 = vld [vmem:[#allocation8 + $0x1c] sm:$0xf]
        %v689 = vld [vmem:[#allocation8 + $0x20] sm:$0xf]
        %v690 = vld [vmem:[#allocation8 + $0x24] sm:$0xf]
        %v691 = vld [vmem:[#allocation8 + $0x28] sm:$0xf]
        %v692 = vld [vmem:[#allocation8 + $0x2c] sm:$0xf]
        %v693 = vld [vmem:[#allocation8 + $0x30] sm:$0xf]
        %v694 = vld [vmem:[#allocation8 + $0x34] sm:$0xf]
        %v695 = vld [vmem:[#allocation8 + $0x38] sm:$0xf]
        %v696 = vld [vmem:[#allocation8 + $0x3c] sm:$0xf]
        %v697 = vld [vmem:[%s9] sm:$0x1]
        %v699 = vperm.slane %v697, 0
        %v717 = vunpack.c.l.b16 %v681
        %v718 = vunpack.c.l.b16 %v682
        %v719 = vunpack.c.l.b16 %v683
        %v720 = vunpack.c.l.b16 %v684
        %v721 = vunpack.c.l.b16 %v685
        %v722 = vunpack.c.l.b16 %v686
        %v723 = vunpack.c.l.b16 %v687
        %v724 = vunpack.c.l.b16 %v688
        %v725 = vunpack.c.l.b16 %v689
        %v726 = vunpack.c.l.b16 %v690
        %v727 = vunpack.c.l.b16 %v691
        %v728 = vunpack.c.l.b16 %v692
        %v729 = vunpack.c.l.b16 %v693
        %v730 = vunpack.c.l.b16 %v694
        %v731 = vunpack.c.l.b16 %v695
        %v732 = vunpack.c.l.b16 %v696
        %v733 = vpack.c.b16 %v718, %v717
        %v734 = vpack.c.b16 %v720, %v719
        %v735 = vpack.c.b16 %v722, %v721
        %v736 = vpack.c.b16 %v724, %v723
        %v737 = vpack.c.b16 %v726, %v725
        %v738 = vpack.c.b16 %v728, %v727
        %v739 = vpack.c.b16 %v730, %v729
        %v740 = vpack.c.b16 %v732, %v731
        %749 = vmatpush.bf16.msra.mxu0 %v740
        %750 = vmatpush.bf16.msra.mxu0 %v739
        %751 = vmatpush.bf16.msra.mxu0 %v738
        %752 = vmatpush.bf16.msra.mxu0 %v737
        %753 = vmatpush.bf16.msra.mxu0 %v736
        %754 = vmatpush.bf16.msra.mxu0 %v735
        %755 = vmatpush.bf16.msra.mxu0 %v734
        %756 = vmatpush.bf16.msra.mxu0 %v733
        %757 = vmatmul.bf16.gmra.mxu0 %v680
        %v758 = vpop.f32.mrf.mxu0
        %v759 = vadd.f32 %v699, %v758
        %v760 = vpop.f32.mrf.mxu0
        %761 = vdwg.mxu0
        %v762 = vmax.f32 %v759, 0.0
        %v763 = vpack.c.bf16 %v762, %v762
        %v764 = vld [vmem:[#allocation10] sm:$0xf]
        %v765 = vld [vmem:[#allocation10 + $0x4] sm:$0xf]
        %v766 = vld [vmem:[#allocation10 + $0x8] sm:$0xf]
        %v767 = vld [vmem:[#allocation10 + $0xc] sm:$0xf]
        %v768 = vld [vmem:[#allocation10 + $0x10] sm:$0xf]
        %v769 = vld [vmem:[#allocation10 + $0x14] sm:$0xf]
        %v770 = vld [vmem:[#allocation10 + $0x18] sm:$0xf]
        %v771 = vld [vmem:[#allocation10 + $0x1c] sm:$0xf]
        %v772 = vld [vmem:[#allocation10 + $0x20] sm:$0xf]
        %v773 = vld [vmem:[#allocation10 + $0x24] sm:$0xf]
        %v774 = vld [vmem:[#allocation10 + $0x28] sm:$0xf]
        %v775 = vld [vmem:[#allocation10 + $0x2c] sm:$0xf]
        %v776 = vld [vmem:[#allocation10 + $0x30] sm:$0xf]
        %v777 = vld [vmem:[#allocation10 + $0x34] sm:$0xf]
        %v778 = vld [vmem:[#allocation10 + $0x38] sm:$0xf]
        %v779 = vld [vmem:[#allocation10 + $0x3c] sm:$0xf]
        %v780 = vld [vmem:[%s10] sm:$0x1]
        %v782 = vperm.slane %v780, 0
        %v800 = vunpack.c.l.b16 %v764
        %v801 = vunpack.c.l.b16 %v765
        %v802 = vunpack.c.l.b16 %v766
        %v803 = vunpack.c.l.b16 %v767
        %v804 = vunpack.c.l.b16 %v768
        %v805 = vunpack.c.l.b16 %v769
        %v806 = vunpack.c.l.b16 %v770
        %v807 = vunpack.c.l.b16 %v771
        %v808 = vunpack.c.l.b16 %v772
        %v809 = vunpack.c.l.b16 %v773
        %v810 = vunpack.c.l.b16 %v774
        %v811 = vunpack.c.l.b16 %v775
        %v812 = vunpack.c.l.b16 %v776
        %v813 = vunpack.c.l.b16 %v777
        %v814 = vunpack.c.l.b16 %v778
        %v815 = vunpack.c.l.b16 %v779
        %v816 = vpack.c.b16 %v801, %v800
        %v817 = vpack.c.b16 %v803, %v802
        %v818 = vpack.c.b16 %v805, %v804
        %v819 = vpack.c.b16 %v807, %v806
        %v820 = vpack.c.b16 %v809, %v808
        %v821 = vpack.c.b16 %v811, %v810
        %v822 = vpack.c.b16 %v813, %v812
        %v823 = vpack.c.b16 %v815, %v814
        %832 = vmatpush.bf16.msra.mxu0 %v823
        %833 = vmatpush.bf16.msra.mxu0 %v822
        %834 = vmatpush.bf16.msra.mxu0 %v821
        %835 = vmatpush.bf16.msra.mxu0 %v820
        %836 = vmatpush.bf16.msra.mxu0 %v819
        %837 = vmatpush.bf16.msra.mxu0 %v818
        %838 = vmatpush.bf16.msra.mxu0 %v817
        %839 = vmatpush.bf16.msra.mxu0 %v816
        %840 = vmatmul.bf16.gmra.mxu0 %v763
        %v841 = vpop.f32.mrf.mxu0
        %v842 = vadd.f32 %v782, %v841
        %v843 = vpop.f32.mrf.mxu0
        %844 = vdwg.mxu0
        %v845 = vmax.f32 %v842, 0.0
        %v846 = vpack.c.bf16 %v845, %v845
        %v847 = vld [vmem:[#allocation11] sm:$0xf]
        %v848 = vld [vmem:[#allocation11 + $0x4] sm:$0xf]
        %v849 = vld [vmem:[#allocation11 + $0x8] sm:$0xf]
        %v850 = vld [vmem:[#allocation11 + $0xc] sm:$0xf]
        %v851 = vld [vmem:[#allocation11 + $0x10] sm:$0xf]
        %v852 = vld [vmem:[#allocation11 + $0x14] sm:$0xf]
        %v853 = vld [vmem:[#allocation11 + $0x18] sm:$0xf]
        %v854 = vld [vmem:[#allocation11 + $0x1c] sm:$0xf]
        %v855 = vld [vmem:[#allocation11 + $0x20] sm:$0xf]
        %v856 = vld [vmem:[#allocation11 + $0x24] sm:$0xf]
        %v857 = vld [vmem:[#allocation11 + $0x28] sm:$0xf]
        %v858 = vld [vmem:[#allocation11 + $0x2c] sm:$0xf]
        %v859 = vld [vmem:[#allocation11 + $0x30] sm:$0xf]
        %v860 = vld [vmem:[#allocation11 + $0x34] sm:$0xf]
        %v861 = vld [vmem:[#allocation11 + $0x38] sm:$0xf]
        %v862 = vld [vmem:[#allocation11 + $0x3c] sm:$0xf]
        %v863 = vld [vmem:[%s11] sm:$0x1]
        %v865 = vperm.slane %v863, 0
        %v883 = vunpack.c.l.b16 %v847
        %v884 = vunpack.c.l.b16 %v848
        %v885 = vunpack.c.l.b16 %v849
        %v886 = vunpack.c.l.b16 %v850
        %v887 = vunpack.c.l.b16 %v851
        %v888 = vunpack.c.l.b16 %v852
        %v889 = vunpack.c.l.b16 %v853
        %v890 = vunpack.c.l.b16 %v854
        %v891 = vunpack.c.l.b16 %v855
        %v892 = vunpack.c.l.b16 %v856
        %v893 = vunpack.c.l.b16 %v857
        %v894 = vunpack.c.l.b16 %v858
        %v895 = vunpack.c.l.b16 %v859
        %v896 = vunpack.c.l.b16 %v860
        %v897 = vunpack.c.l.b16 %v861
        %v898 = vunpack.c.l.b16 %v862
        %v899 = vpack.c.b16 %v884, %v883
        %v900 = vpack.c.b16 %v886, %v885
        %v901 = vpack.c.b16 %v888, %v887
        %v902 = vpack.c.b16 %v890, %v889
        %v903 = vpack.c.b16 %v892, %v891
        %v904 = vpack.c.b16 %v894, %v893
        %v905 = vpack.c.b16 %v896, %v895
        %v906 = vpack.c.b16 %v898, %v897
        %915 = vmatpush.bf16.msra.mxu0 %v906
        %916 = vmatpush.bf16.msra.mxu0 %v905
        %917 = vmatpush.bf16.msra.mxu0 %v904
        %918 = vmatpush.bf16.msra.mxu0 %v903
        %919 = vmatpush.bf16.msra.mxu0 %v902
        %920 = vmatpush.bf16.msra.mxu0 %v901
        %921 = vmatpush.bf16.msra.mxu0 %v900
        %922 = vmatpush.bf16.msra.mxu0 %v899
        %923 = vmatmul.bf16.gmra.mxu0 %v846
        %v924 = vpop.f32.mrf.mxu0
        %v925 = vadd.f32 %v865, %v924
        %v926 = vpop.f32.mrf.mxu0
        %927 = vdwg.mxu0
        %v928 = vmax.f32 %v925, 0.0
        %v929 = vpack.c.bf16 %v928, %v928
        %v930 = vld [vmem:[#allocation13] sm:$0xf]
        %v931 = vld [vmem:[#allocation13 + $0x4] sm:$0xf]
        %v932 = vld [vmem:[#allocation13 + $0x8] sm:$0xf]
        %v933 = vld [vmem:[#allocation13 + $0xc] sm:$0xf]
        %v934 = vld [vmem:[#allocation13 + $0x10] sm:$0xf]
        %v935 = vld [vmem:[#allocation13 + $0x14] sm:$0xf]
        %v936 = vld [vmem:[#allocation13 + $0x18] sm:$0xf]
        %v937 = vld [vmem:[#allocation13 + $0x1c] sm:$0xf]
        %v938 = vld [vmem:[#allocation13 + $0x20] sm:$0xf]
        %v939 = vld [vmem:[#allocation13 + $0x24] sm:$0xf]
        %v940 = vld [vmem:[#allocation13 + $0x28] sm:$0xf]
        %v941 = vld [vmem:[#allocation13 + $0x2c] sm:$0xf]
        %v942 = vld [vmem:[#allocation13 + $0x30] sm:$0xf]
        %v943 = vld [vmem:[#allocation13 + $0x34] sm:$0xf]
        %v944 = vld [vmem:[#allocation13 + $0x38] sm:$0xf]
        %v945 = vld [vmem:[#allocation13 + $0x3c] sm:$0xf]
        %v946 = vld [vmem:[%s12] sm:$0x1]
        %v948 = vperm.slane %v946, 0
        %v966 = vunpack.c.l.b16 %v930
        %v967 = vunpack.c.l.b16 %v931
        %v968 = vunpack.c.l.b16 %v932
        %v969 = vunpack.c.l.b16 %v933
        %v970 = vunpack.c.l.b16 %v934
        %v971 = vunpack.c.l.b16 %v935
        %v972 = vunpack.c.l.b16 %v936
        %v973 = vunpack.c.l.b16 %v937
        %v974 = vunpack.c.l.b16 %v938
        %v975 = vunpack.c.l.b16 %v939
        %v976 = vunpack.c.l.b16 %v940
        %v977 = vunpack.c.l.b16 %v941
        %v978 = vunpack.c.l.b16 %v942
        %v979 = vunpack.c.l.b16 %v943
        %v980 = vunpack.c.l.b16 %v944
        %v981 = vunpack.c.l.b16 %v945
        %v982 = vpack.c.b16 %v967, %v966
        %v983 = vpack.c.b16 %v969, %v968
        %v984 = vpack.c.b16 %v971, %v970
        %v985 = vpack.c.b16 %v973, %v972
        %v986 = vpack.c.b16 %v975, %v974
        %v987 = vpack.c.b16 %v977, %v976
        %v988 = vpack.c.b16 %v979, %v978
        %v989 = vpack.c.b16 %v981, %v980
        %998 = vmatpush.bf16.msra.mxu0 %v989
        %999 = vmatpush.bf16.msra.mxu0 %v988
        %1000 = vmatpush.bf16.msra.mxu0 %v987
        %1001 = vmatpush.bf16.msra.mxu0 %v986
        %1002 = vmatpush.bf16.msra.mxu0 %v985
        %1003 = vmatpush.bf16.msra.mxu0 %v984
        %1004 = vmatpush.bf16.msra.mxu0 %v983
        %1005 = vmatpush.bf16.msra.mxu0 %v982
        %1006 = vmatmul.bf16.gmra.mxu0 %v929
        %v1007 = vpop.f32.mrf.mxu0
        %v1008 = vadd.f32 %v948, %v1007
        %v1009 = vpop.f32.mrf.mxu0
        %1010 = vdwg.mxu0
        %1011 = vmax.xlane.f32.xlu0 %v1008
        %v1012 = vpop.xlane.xlu0 %1011
        %v1013 = vsub.f32 %v1008, %v1012
        %v1014 = vmul.f32 %v1013, 1.442695
        %v1015 = vpow.pop %v1014
        %1016 = vadd.xlane.f32.xlu0 %v1015
        %v1017 = vpop.xlane.xlu0 %1016
        %v1018 = vrcp.pop %v1017
        %v1019 = vmul.f32 %v1015, %v1018
        %1020 = vst [vmem:[%s556] sm:$0xff] %v1019
        %s1021 = sand.u32 %s319, 1
        %s1022 = scalar_lea.sflag [#allocation4], %s1021
        %s1023 = sand.u32 %s319, 1
        %s1024 = smul.addr %s1023, 8
        %s1025 = scalar_lea.vmem [#allocation14], %s1024
        // Predicated region
        $region101: #{tpu_custom_call.1} parent=71 // pred_check
          %p1026 = pneg %p329
        $region102: #{tpu_custom_call.1} parent=71 // pred_check_branch
          %1028 = sbr.rel (%p1026) target = $region104
        $region103: #{tpu_custom_call.1} parent=71 // pred_region
          %1030 = vsyncadd %s1022, 0
          %s1031 = smul.addr %s33, 8
          %s1032 = scalar_lea.hbm %s13, %s1031
          %s1034 = sshll.u32 %s1025, 4
          %s1035 = int_to_ptr.vmem [resolvable:$true] %s1034
          %s1036 = sshll.u32 %s1032, 4
          %s1037 = int_to_ptr.hbm [resolvable:$true] %s1036
          %1039 = dma.vmem_to_hbm [thread:$0]  %s1035, 128, %s1037, %s1022
        $region104: #{tpu_custom_call.1} parent=71 // pred_fallthru
          _
      $region72: #{tpu_custom_call.1} parent=5 // pred_fallthru
        _
      %p1040 = scmp.le.s32.totalorder 2, %s28
      // Predicated region
      $region105: #{tpu_custom_call.1} parent=5 // pred_check
        %p1041 = pneg %p1040
      $region106: #{tpu_custom_call.1} parent=5 // pred_check_branch
        %1043 = sbr.rel (%p1041) target = $region108
      $region107: #{tpu_custom_call.1} parent=5 // pred_region
        %s1044 = ssub.s32 %s28, 2
        // Predicated region
        $region109: #{tpu_custom_call.1} parent=107 // pred_check
          %p1045 = pneg %p335
        $region110: #{tpu_custom_call.1} parent=107 // pred_check_branch
          %1047 = sbr.rel (%p1045) target = $region112
        $region111: #{tpu_custom_call.1} parent=107 // pred_region
          %s1048 = sand.u32 %s320, 1
          %s1049 = scalar_lea.sflag [#allocation4], %s1048
          %s1050 = sand.u32 %s320, 1
          %s1051 = smul.addr %s1050, 8
          %s1052 = scalar_lea.vmem [#allocation14], %s1051
          %1054 = dma.done %s1049, 128
        $region112: #{tpu_custom_call.1} parent=107 // pred_fallthru
          _
      $region108: #{tpu_custom_call.1} parent=5 // pred_fallthru
        _
    $region6: #{tpu_custom_call.1} parent=1 // loop_footer
      %s32 = sadd.s32 1, %s28
    $region7: #{tpu_custom_call.1} parent=1 // loop_footer_branch
      %27 = sbr.rel target = $region3
    $region8: #{tpu_custom_call.1} parent=1 // loop_exit
      _
    %1055 = vsyncpa [#allocation3], 1
    %s1056 = scalar_lea.sflag [#allocation3], 1
    %1057 = vsyncpa %s1056, 1
    %1058 = vsyncpa [#allocation6], 1
    %1059 = vsyncpa [#allocation9], 1
    %1060 = vsyncpa [#allocation12], 1
    %1061 = vsyncpa [#allocation4], 1
    %s1062 = scalar_lea.sflag [#allocation4], 1
    %1063 = vsyncpa %s1062, 1

</llo_original>
